<compile_context>
chip_gen: v5e
topology: v5e:2x2
jax: 0.10.0
libtpu: 0.0.40
codegen_flags: <defaults>
</compile_context>

<pallas_src>
import functools

import jax
import jax.numpy as jnp
from jax.experimental import pallas as pl
from jax.experimental.pallas import tpu as pltpu


def _round_up(x: int, m: int) -> int:
    return ((x + m - 1) // m) * m


def _round_down(x: int, m: int) -> int:
    return (x // m) * m


def _read_kernel(u_ref, wg_ref, bg_ref, wt_ref, bt_ref, gamma_ref, tau_ref,
                 *, tau_min: float):
    """One row-tile: gamma = u@WgT + bg ; tau = exp(u@WtT + bt) + tau_min."""
    u = u_ref[...]                                                  # (tile, p*D_agg)
    g = jnp.dot(u, wg_ref[...], preferred_element_type=jnp.float32) + bg_ref[...]
    t = jnp.dot(u, wt_ref[...], preferred_element_type=jnp.float32) + bt_ref[...]
    gamma_ref[...] = g.astype(gamma_ref.dtype)
    tau_ref[...] = (jnp.exp(t) + tau_min).astype(tau_ref.dtype)


def _choose_pack(R: int, D_agg: int, d: int) -> int:
    """Pack p logical rows per physical row so feature widths become 128-lane dense."""
    if min(D_agg, d) >= 128:
        return 1
    p = 1
    while p < 8 and p * min(D_agg, d) < 128:
        p *= 2
    # Must divide the row count (free contiguous reshape) and keep widths modest.
    while p > 1 and (R % p != 0 or p * D_agg > 1024 or p * d > 1024):
        p //= 2
    return p


def _block_diag(w_t: jax.Array, p: int) -> jax.Array:
    """(D_agg, d) -> block-diagonal (p*D_agg, p*d)."""
    if p == 1:
        return w_t
    k, d = w_t.shape
    eye = jnp.eye(p, dtype=w_t.dtype)
    return jnp.einsum("pq,kd->pkqd", eye, w_t).reshape(p * k, p * d)


def read_function(u, wg, bg, wt, bt, tau_min, *, tile_r: int = 8192):
    """Pallas implementation of ReadFunction.forward.

    Args:
        u:  (S, M, N, D_agg) aggregations.
        wg: (d, D_agg) weight of f_gamma (PyTorch Linear convention).
        bg: (d,)       bias of f_gamma.
        wt: (d, D_agg) weight of f_tau.
        bt: (d,)       bias of f_tau.
        tau_min: python float, minimum std.
        tile_r: row tile size in *logical* rows of the flattened input.

    Returns:
        (gamma, tau), each of shape (S, M, N, d).
    """
    S, M, N, D_agg = u.shape
    d = wg.shape[0]
    R = S * M * N

    # Lane packing: p logical rows per physical row (contiguous, free reshape).
    p = _choose_pack(R, D_agg, d)
    Rp = R // p
    in_w = p * D_agg
    out_w = p * d

    u2 = u.reshape(Rp, in_w)

    wg_blk = _block_diag(jnp.transpose(wg), p)                       # (p*D_agg, p*d)
    wt_blk = _block_diag(jnp.transpose(wt), p)
    bg_t = jnp.tile(bg.astype(jnp.float32), p).reshape(1, out_w)
    bt_t = jnp.tile(bt.astype(jnp.float32), p).reshape(1, out_w)

    # Row tile (in packed rows): big, multiple of 8, capped; single full-extent
    # block when the whole (packed) input fits one tile.
    tile_rows = max(8, _round_down(max(int(tile_r) // p, 8), 8))
    tile_rows = min(tile_rows, 16384)
    if tile_rows >= Rp:
        tile_rows = Rp                              # one block, full row extent
    grid = (pl.cdiv(Rp, tile_rows),)

    # VMEM budget: double-buffered input + two outputs (128-lane padded) + weights.
    def _padded_bytes(rows, cols):
        return _round_up(max(rows, 1), 8) * _round_up(cols, 128) * 4
    vmem_needed = (2 * _padded_bytes(tile_rows, in_w)
                   + 2 * 2 * _padded_bytes(tile_rows, out_w)
                   + 2 * _padded_bytes(in_w, out_w)
                   + 2 * _padded_bytes(1, out_w))
    vmem_limit = int(min(max(vmem_needed + (4 << 20), 32 << 20), 64 << 20))

    itemsize = jnp.dtype(u.dtype).itemsize
    cost = pl.CostEstimate(
        flops=2 * R * D_agg * (2 * d),
        transcendentals=R * d,
        bytes_accessed=itemsize * R * (D_agg + 2 * d)
                       + 2 * 4 * in_w * out_w + 2 * 4 * out_w)

    kernel = functools.partial(_read_kernel, tau_min=float(tau_min))

    gamma_p, tau_p = pl.pallas_call(
        kernel,
        out_shape=(jax.ShapeDtypeStruct((Rp, out_w), u.dtype),
                   jax.ShapeDtypeStruct((Rp, out_w), u.dtype)),
        grid_spec=pl.GridSpec(
            grid=grid,
            in_specs=[
                pl.BlockSpec((tile_rows, in_w), lambda i: (i, 0)),   # u rows (streamed)
                pl.BlockSpec((in_w, out_w), lambda i: (0, 0)),       # Wg^T (resident)
                pl.BlockSpec((1, out_w), lambda i: (0, 0)),          # bg   (resident)
                pl.BlockSpec((in_w, out_w), lambda i: (0, 0)),       # Wt^T (resident)
                pl.BlockSpec((1, out_w), lambda i: (0, 0)),          # bt   (resident)
            ],
            out_specs=(
                pl.BlockSpec((tile_rows, out_w), lambda i: (i, 0)),  # gamma
                pl.BlockSpec((tile_rows, out_w), lambda i: (i, 0)),  # tau
            ),
        ),
        compiler_params=pltpu.CompilerParams(
            dimension_semantics=("parallel",),
            vmem_limit_bytes=vmem_limit),
        cost_estimate=cost,
    )(u2, wg_blk, bg_t, wt_blk, bt_t)

    gamma = gamma_p.reshape(S, M, N, d)     # contiguous un-pack, free
    tau = tau_p.reshape(S, M, N, d)
    return gamma, tau


def _reference(u, wg, bg, wt, bt, tau_min):
    gamma = jnp.einsum("smnk,dk->smnd", u, wg) + bg
    tau = jnp.exp(jnp.einsum("smnk,dk->smnd", u, wt) + bt) + tau_min
    return gamma, tau


if __name__ == "__main__":
    # Small shapes implied by the forward: u is (S, M, N, D_agg).
    S, M, N, D_agg, d = 2, 4, 8, 32, 16
    tau_min = 0.01

    key = jax.random.PRNGKey(0)
    k_u, k_wg, k_bg, k_wt, k_bt = jax.random.split(key, 5)

    u = jax.random.normal(k_u, (S, M, N, D_agg), dtype=jnp.float32)
    # Deterministic synthetic parameters (Linear(D_agg, d) shapes).
    wg = jax.random.normal(k_wg, (d, D_agg), dtype=jnp.float32) * 0.1
    bg = jax.random.normal(k_bg, (d,), dtype=jnp.float32) * 0.1
    wt = jax.random.normal(k_wt, (d, D_agg), dtype=jnp.float32) * 0.1
    bt = jax.random.normal(k_bt, (d,), dtype=jnp.float32) * 0.1

    gamma, tau = jax.block_until_ready(
        read_function(u, wg, bg, wt, bt, tau_min))

    gamma_ref, tau_ref = _reference(u, wg, bg, wt, bt, tau_min)

    assert gamma.shape == (S, M, N, d) and tau.shape == (S, M, N, d)
    assert jnp.allclose(gamma, gamma_ref, atol=1e-5, rtol=1e-5)
    assert jnp.allclose(tau, tau_ref, atol=1e-5, rtol=1e-5)
    assert bool(jnp.all(tau >= tau_min))

    print("KERNEL_OK")
</pallas_src>

<mosaic_0001>
module attributes {stable_mosaic.version = 11 : i64} {
  func.func @_read_kernel(%arg0: i32, %arg1: memref<8x256xf32, #tpu.memory_space<vmem>>, %arg2: memref<256x128xf32, #tpu.memory_space<vmem>>, %arg3: memref<1x128xf32, #tpu.memory_space<vmem>>, %arg4: memref<256x128xf32, #tpu.memory_space<vmem>>, %arg5: memref<1x128xf32, #tpu.memory_space<vmem>>, %arg6: memref<8x128xf32, #tpu.memory_space<vmem>>, %arg7: memref<8x128xf32, #tpu.memory_space<vmem>>) attributes {dimension_semantics = [#tpu.dimension_semantics<parallel>], iteration_bounds = array<i64: 1>, scalar_prefetch = 0 : i64, scratch_operands = 0 : i64, tpu.core_type = #tpu.core_type<tc>, window_params = [{transform_indices = @transform_0, window_bounds = array<i64: 8, 256>}, {pipeline_mode = #tpu.pipeline_mode<synchronous>, transform_indices = @transform_1, window_bounds = array<i64: 256, 128>}, {pipeline_mode = #tpu.pipeline_mode<synchronous>, transform_indices = @transform_2, window_bounds = array<i64: 1, 128>}, {pipeline_mode = #tpu.pipeline_mode<synchronous>, transform_indices = @transform_3, window_bounds = array<i64: 256, 128>}, {pipeline_mode = #tpu.pipeline_mode<synchronous>, transform_indices = @transform_4, window_bounds = array<i64: 1, 128>}, {transform_indices = @transform_5, window_bounds = array<i64: 8, 128>}, {transform_indices = @transform_6, window_bounds = array<i64: 8, 128>}]} {
    %c0 = arith.constant 0 : index
    %c0_0 = arith.constant 0 : index
    %0 = vector.load %arg1[%c0, %c0_0] : memref<8x256xf32, #tpu.memory_space<vmem>>, vector<8x256xf32>
    %c0_1 = arith.constant 0 : index
    %c0_2 = arith.constant 0 : index
    %1 = vector.load %arg2[%c0_1, %c0_2] : memref<256x128xf32, #tpu.memory_space<vmem>>, vector<256x128xf32>
    %cst = arith.constant dense<0.000000e+00> : vector<8x128xf32>
    %2 = tpu.matmul %0, %1, %cst {dimension_numbers = #tpu.dot_dimension_numbers<[1], [0], [0], [1], [0, 0, 1, 1], [], []>} : vector<8x256xf32>, vector<256x128xf32>, vector<8x128xf32> -> vector<8x128xf32>
    %c0_3 = arith.constant 0 : index
    %c0_4 = arith.constant 0 : index
    %3 = vector.load %arg3[%c0_3, %c0_4] : memref<1x128xf32, #tpu.memory_space<vmem>>, vector<1x128xf32>
    %4 = vector.broadcast %3 : vector<1x128xf32> to vector<8x128xf32>
    %5 = arith.addf %2, %4 : vector<8x128xf32>
    %c0_5 = arith.constant 0 : index
    %c0_6 = arith.constant 0 : index
    %6 = vector.load %arg4[%c0_5, %c0_6] : memref<256x128xf32, #tpu.memory_space<vmem>>, vector<256x128xf32>
    %cst_7 = arith.constant dense<0.000000e+00> : vector<8x128xf32>
    %7 = tpu.matmul %0, %6, %cst_7 {dimension_numbers = #tpu.dot_dimension_numbers<[1], [0], [0], [1], [0, 0, 1, 1], [], []>} : vector<8x256xf32>, vector<256x128xf32>, vector<8x128xf32> -> vector<8x128xf32>
    %c0_8 = arith.constant 0 : index
    %c0_9 = arith.constant 0 : index
    %8 = vector.load %arg5[%c0_8, %c0_9] : memref<1x128xf32, #tpu.memory_space<vmem>>, vector<1x128xf32>
    %9 = vector.broadcast %8 : vector<1x128xf32> to vector<8x128xf32>
    %10 = arith.addf %7, %9 : vector<8x128xf32>
    %c0_10 = arith.constant 0 : index
    %c0_11 = arith.constant 0 : index
    %11 = vector.load %arg6[%c0_10, %c0_11] : memref<8x128xf32, #tpu.memory_space<vmem>>, vector<8x128xf32>
    tpu.vector_store %arg6[%c0_10, %c0_11], %5 {strides = array<i32>} : memref<8x128xf32, #tpu.memory_space<vmem>>, vector<8x128xf32>,
    %12 = math.exp %10 : vector<8x128xf32>
    %cst_12 = arith.constant 0.00999999977 : f32
    %13 = vector.broadcast %cst_12 : f32 to vector<8x128xf32>
    %14 = arith.addf %12, %13 : vector<8x128xf32>
    %c0_13 = arith.constant 0 : index
    %c0_14 = arith.constant 0 : index
    %15 = vector.load %arg7[%c0_13, %c0_14] : memref<8x128xf32, #tpu.memory_space<vmem>>, vector<8x128xf32>
    tpu.vector_store %arg7[%c0_13, %c0_14], %14 {strides = array<i32>} : memref<8x128xf32, #tpu.memory_space<vmem>>, vector<8x128xf32>,
    return
  }
  func.func @transform_0(%arg0: i32) -> (i32, i32) {
    %c0_i32 = arith.constant 0 : i32
    %c0_i32_0 = arith.constant 0 : i32
    return %arg0, %c0_i32 : i32, i32
  }
  func.func @transform_1(%arg0: i32) -> (i32, i32) {
    %c0_i32 = arith.constant 0 : i32
    %c0_i32_0 = arith.constant 0 : i32
    %c0_i32_1 = arith.constant 0 : i32
    return %c0_i32, %c0_i32_0 : i32, i32
  }
  func.func @transform_2(%arg0: i32) -> (i32, i32) {
    %c0_i32 = arith.constant 0 : i32
    %c0_i32_0 = arith.constant 0 : i32
    %c0_i32_1 = arith.constant 0 : i32
    return %c0_i32, %c0_i32_0 : i32, i32
  }
  func.func @transform_3(%arg0: i32) -> (i32, i32) {
    %c0_i32 = arith.constant 0 : i32
    %c0_i32_0 = arith.constant 0 : i32
    %c0_i32_1 = arith.constant 0 : i32
    return %c0_i32, %c0_i32_0 : i32, i32
  }
  func.func @transform_4(%arg0: i32) -> (i32, i32) {
    %c0_i32 = arith.constant 0 : i32
    %c0_i32_0 = arith.constant 0 : i32
    %c0_i32_1 = arith.constant 0 : i32
    return %c0_i32, %c0_i32_0 : i32, i32
  }
  func.func @transform_5(%arg0: i32) -> (i32, i32) {
    %c0_i32 = arith.constant 0 : i32
    %c0_i32_0 = arith.constant 0 : i32
    return %arg0, %c0_i32 : i32, i32
  }
  func.func @transform_6(%arg0: i32) -> (i32, i32) {
    %c0_i32 = arith.constant 0 : i32
    %c0_i32_0 = arith.constant 0 : i32
    return %arg0, %c0_i32 : i32, i32
  }
}

</mosaic_0001>

<llo_original>
// kernel: tpu_custom_call.1
$region0: #{tpu_custom_call.1}
  #allocation0 [shape = 'u32[]', space=smem, size = 0x4, offset = 0x4, fixed_abs, tag = 'smem constant byte address 0x4 - core index']
  #allocation1 [shape = 'u32[72,128]{1,0:T(1,128)}', space=vmem, size = 0x9000, scoped, tag = 'internal scratch']
  %s0 = inlined_call_operand.hbm [shape: f32[8,256], index: 0, kind: input, shape index: {}]
  %s1 = inlined_call_operand.hbm [shape: f32[256,128], index: 1, kind: input, shape index: {}]
  %s2 = inlined_call_operand.vmem [shape: f32[1,128], index: 2, kind: input, shape index: {}]
  %s3 = inlined_call_operand.hbm [shape: f32[256,128], index: 3, kind: input, shape index: {}]
  %s4 = inlined_call_operand.vmem [shape: f32[1,128], index: 4, kind: input, shape index: {}]
  %s5 = inlined_call_operand.hbm [shape: f32[8,128], index: 5, kind: output, shape index: {0}]
  %s6 = inlined_call_operand.hbm [shape: f32[8,128], index: 6, kind: output, shape index: {1}]
  %7 = xla_tuple %s5, %s6
  %s8 = sld [smem:[#allocation0]]
  $region50: #{tpu_custom_call.1} parent=0
    _
  %s10 = ssub.s32 1, %s8
  %s11 = scalar_select 0, %s10, %s8
  $region1: #{tpu_custom_call.1} parent=0
    #allocation2 [shape = 'u8[8192]{0}', space=vmem, size = 0x2000, scoped, tag = 'input window, operand 0, single buffered']
    #allocation3 [shape = 's32[1]{0}', space=sflag, size = 0x4, scoped, tag = 'scoped memory for tpu_custom_call.1']
    #allocation4 [shape = 's32[1]{0}', space=sflag, size = 0x4, scoped, tag = 'scoped memory for tpu_custom_call.1']
    #allocation5 [shape = 'u8[131072]{0}', space=vmem, size = 0x20000, scoped, tag = 'input window, operand 1, single buffered']
    #allocation6 [shape = 's32[1]{0}', space=sflag, size = 0x4, scoped, tag = 'scoped memory for tpu_custom_call.1']
    #allocation7 [shape = 'u8[131072]{0}', space=vmem, size = 0x20000, scoped, tag = 'input window, operand 3, single buffered']
    #allocation8 [shape = 'u8[4096]{0}', space=vmem, size = 0x1000, scoped, tag = 'output window, operand 0, single buffered']
    #allocation9 [shape = 'u8[4096]{0}', space=vmem, size = 0x1000, scoped, tag = 'output window, operand 1, single buffered']
    #allocation10 [shape = 's32[1]{0}', space=sflag, size = 0x4, scoped, tag = 'scoped memory for tpu_custom_call.1']
    %12 = vsyncpa [#allocation3], 0
    %13 = vsyncpa [#allocation6], 0
    %14 = vsyncpa [#allocation4], 0
    %15 = vsyncpa [#allocation10], 0
    // Predicated region
    $region2: #{tpu_custom_call.1} parent=1 // pred_check
      _
    $region3: #{tpu_custom_call.1} parent=1 // pred_check_branch
      %17 = sbr.rel (0) target = $region5
    $region4: #{tpu_custom_call.1} parent=1 // pred_region
      %19 = vsyncadd [#allocation3], 0
      %s21 = sshll.u32 %s0, 4
      %s22 = int_to_ptr.hbm [resolvable:$true] %s21
      %s23 = sshll.u32 [#allocation2], 4
      %s24 = int_to_ptr.vmem [resolvable:$true] %s23
      %26 = dma.hbm_to_vmem [thread:$0]  %s22, 256, %s24, [#allocation3]
    $region5: #{tpu_custom_call.1} parent=1 // pred_fallthru
      _
    // Predicated region
    $region6: #{tpu_custom_call.1} parent=1 // pred_check
      _
    $region7: #{tpu_custom_call.1} parent=1 // pred_check_branch
      %28 = sbr.rel (0) target = $region9
    $region8: #{tpu_custom_call.1} parent=1 // pred_region
      %30 = vsyncadd [#allocation6], 0
      %s31 = sshll.u32 %s1, 4
      %s32 = int_to_ptr.hbm [resolvable:$true] %s31
      %s33 = sshll.u32 [#allocation5], 4
      %s34 = int_to_ptr.vmem [resolvable:$true] %s33
      %39 = dma.hbm_to_vmem [thread:$0]  %s32, 4096, %s34, [#allocation6], 128, 128, 8
    $region9: #{tpu_custom_call.1} parent=1 // pred_fallthru
      _
    // Predicated region
    $region10: #{tpu_custom_call.1} parent=1 // pred_check
      _
    $region11: #{tpu_custom_call.1} parent=1 // pred_check_branch
      %41 = sbr.rel (0) target = $region13
    $region12: #{tpu_custom_call.1} parent=1 // pred_region
      _
    $region13: #{tpu_custom_call.1} parent=1 // pred_fallthru
      _
    // Predicated region
    $region14: #{tpu_custom_call.1} parent=1 // pred_check
      _
    $region15: #{tpu_custom_call.1} parent=1 // pred_check_branch
      %43 = sbr.rel (0) target = $region17
    $region16: #{tpu_custom_call.1} parent=1 // pred_region
      %45 = vsyncadd [#allocation6], 0
      %s46 = sshll.u32 %s3, 4
      %s47 = int_to_ptr.hbm [resolvable:$true] %s46
      %s48 = sshll.u32 [#allocation7], 4
      %s49 = int_to_ptr.vmem [resolvable:$true] %s48
      %54 = dma.hbm_to_vmem [thread:$0]  %s47, 4096, %s49, [#allocation6], 128, 128, 8
    $region17: #{tpu_custom_call.1} parent=1 // pred_fallthru
      _
    // Predicated region
    $region18: #{tpu_custom_call.1} parent=1 // pred_check
      _
    $region19: #{tpu_custom_call.1} parent=1 // pred_check_branch
      %56 = sbr.rel (0) target = $region21
    $region20: #{tpu_custom_call.1} parent=1 // pred_region
      _
    $region21: #{tpu_custom_call.1} parent=1 // pred_fallthru
      _
    // Predicated region
    $region22: #{tpu_custom_call.1} parent=1 // pred_check
      _
    $region23: #{tpu_custom_call.1} parent=1 // pred_check_branch
      %58 = sbr.rel (0) target = $region25
    $region24: #{tpu_custom_call.1} parent=1 // pred_region
      %60 = dma.done [#allocation3], 256
    $region25: #{tpu_custom_call.1} parent=1 // pred_fallthru
      _
    // Predicated region
    $region26: #{tpu_custom_call.1} parent=1 // pred_check
      _
    $region27: #{tpu_custom_call.1} parent=1 // pred_check_branch
      %62 = sbr.rel (0) target = $region29
    $region28: #{tpu_custom_call.1} parent=1 // pred_region
      %64 = dma.done [#allocation6], 4096
    $region29: #{tpu_custom_call.1} parent=1 // pred_fallthru
      _
    // Predicated region
    $region30: #{tpu_custom_call.1} parent=1 // pred_check
      _
    $region31: #{tpu_custom_call.1} parent=1 // pred_check_branch
      %66 = sbr.rel (0) target = $region33
    $region32: #{tpu_custom_call.1} parent=1 // pred_region
      %68 = dma.done [#allocation6], 4096
    $region33: #{tpu_custom_call.1} parent=1 // pred_fallthru
      _
    %v69 = vld [vmem:[#allocation2] sm:$0xff]
    %v70 = vld [vmem:[#allocation2 + $0x8] sm:$0xff]
    %v71 = vld [vmem:[#allocation5] sm:$0xff]
    %v72 = vld [vmem:[#allocation5 + $0x8] sm:$0xff]
    %v73 = vld [vmem:[#allocation5 + $0x10] sm:$0xff]
    %v74 = vld [vmem:[#allocation5 + $0x18] sm:$0xff]
    %v75 = vld [vmem:[#allocation5 + $0x20] sm:$0xff]
    %v76 = vld [vmem:[#allocation5 + $0x28] sm:$0xff]
    %v77 = vld [vmem:[#allocation5 + $0x30] sm:$0xff]
    %v78 = vld [vmem:[#allocation5 + $0x38] sm:$0xff]
    %v79 = vld [vmem:[#allocation5 + $0x40] sm:$0xff]
    %v80 = vld [vmem:[#allocation5 + $0x48] sm:$0xff]
    %v81 = vld [vmem:[#allocation5 + $0x50] sm:$0xff]
    %v82 = vld [vmem:[#allocation5 + $0x58] sm:$0xff]
    %v83 = vld [vmem:[#allocation5 + $0x60] sm:$0xff]
    %v84 = vld [vmem:[#allocation5 + $0x68] sm:$0xff]
    %v85 = vld [vmem:[#allocation5 + $0x70] sm:$0xff]
    %v86 = vld [vmem:[#allocation5 + $0x78] sm:$0xff]
    %v87 = vld [vmem:[#allocation5 + $0x80] sm:$0xff]
    %v88 = vld [vmem:[#allocation5 + $0x88] sm:$0xff]
    %v89 = vld [vmem:[#allocation5 + $0x90] sm:$0xff]
    %v90 = vld [vmem:[#allocation5 + $0x98] sm:$0xff]
    %v91 = vld [vmem:[#allocation5 + $0xa0] sm:$0xff]
    %v92 = vld [vmem:[#allocation5 + $0xa8] sm:$0xff]
    %v93 = vld [vmem:[#allocation5 + $0xb0] sm:$0xff]
    %v94 = vld [vmem:[#allocation5 + $0xb8] sm:$0xff]
    %v95 = vld [vmem:[#allocation5 + $0xc0] sm:$0xff]
    %v96 = vld [vmem:[#allocation5 + $0xc8] sm:$0xff]
    %v97 = vld [vmem:[#allocation5 + $0xd0] sm:$0xff]
    %v98 = vld [vmem:[#allocation5 + $0xd8] sm:$0xff]
    %v99 = vld [vmem:[#allocation5 + $0xe0] sm:$0xff]
    %v100 = vld [vmem:[#allocation5 + $0xe8] sm:$0xff]
    %v101 = vld [vmem:[#allocation5 + $0xf0] sm:$0xff]
    %v102 = vld [vmem:[#allocation5 + $0xf8] sm:$0xff]
    %v103 = vld [vmem:[%s2] sm:$0x1]
    %v105 = vperm.slane %v103, 0
    %107 = vmatpush.msra.mxu0 %v86
    %108 = vmatpush.msra.mxu0 %v85
    %109 = vmatpush.msra.mxu0 %v84
    %110 = vmatpush.msra.mxu0 %v83
    %111 = vmatpush.msra.mxu0 %v82
    %112 = vmatpush.msra.mxu0 %v81
    %113 = vmatpush.msra.mxu0 %v80
    %114 = vmatpush.msra.mxu0 %v79
    %115 = vmatpush.msra.mxu0 %v78
    %116 = vmatpush.msra.mxu0 %v77
    %117 = vmatpush.msra.mxu0 %v76
    %118 = vmatpush.msra.mxu0 %v75
    %119 = vmatpush.msra.mxu0 %v74
    %120 = vmatpush.msra.mxu0 %v73
    %121 = vmatpush.msra.mxu0 %v72
    %122 = vmatpush.msra.mxu0 %v71
    %123 = vmatmul.f32.gmra.mxu0 %v69
    %v124 = vpop.f32.mrf.mxu0
    %v125 = vadd.f32 %v105, %v124
    %126 = vdwg.mxu0
    %127 = vmatpush.msra.mxu0 %v102
    %128 = vmatpush.msra.mxu0 %v101
    %129 = vmatpush.msra.mxu0 %v100
    %130 = vmatpush.msra.mxu0 %v99
    %131 = vmatpush.msra.mxu0 %v98
    %132 = vmatpush.msra.mxu0 %v97
    %133 = vmatpush.msra.mxu0 %v96
    %134 = vmatpush.msra.mxu0 %v95
    %135 = vmatpush.msra.mxu0 %v94
    %136 = vmatpush.msra.mxu0 %v93
    %137 = vmatpush.msra.mxu0 %v92
    %138 = vmatpush.msra.mxu0 %v91
    %139 = vmatpush.msra.mxu0 %v90
    %140 = vmatpush.msra.mxu0 %v89
    %141 = vmatpush.msra.mxu0 %v88
    %142 = vmatpush.msra.mxu0 %v87
    %143 = vmatmul.f32.gmra.mxu0 %v70
    %v144 = vpop.f32.mrf.mxu0
    %v145 = vadd.f32 %v125, %v144
    %146 = vdwg.mxu0
    %v147 = vld [vmem:[#allocation7] sm:$0xff]
    %v148 = vld [vmem:[#allocation7 + $0x8] sm:$0xff]
    %v149 = vld [vmem:[#allocation7 + $0x10] sm:$0xff]
    %v150 = vld [vmem:[#allocation7 + $0x18] sm:$0xff]
    %v151 = vld [vmem:[#allocation7 + $0x20] sm:$0xff]
    %v152 = vld [vmem:[#allocation7 + $0x28] sm:$0xff]
    %v153 = vld [vmem:[#allocation7 + $0x30] sm:$0xff]
    %v154 = vld [vmem:[#allocation7 + $0x38] sm:$0xff]
    %v155 = vld [vmem:[#allocation7 + $0x40] sm:$0xff]
    %v156 = vld [vmem:[#allocation7 + $0x48] sm:$0xff]
    %v157 = vld [vmem:[#allocation7 + $0x50] sm:$0xff]
    %v158 = vld [vmem:[#allocation7 + $0x58] sm:$0xff]
    %v159 = vld [vmem:[#allocation7 + $0x60] sm:$0xff]
    %v160 = vld [vmem:[#allocation7 + $0x68] sm:$0xff]
    %v161 = vld [vmem:[#allocation7 + $0x70] sm:$0xff]
    %v162 = vld [vmem:[#allocation7 + $0x78] sm:$0xff]
    %v163 = vld [vmem:[#allocation7 + $0x80] sm:$0xff]
    %v164 = vld [vmem:[#allocation7 + $0x88] sm:$0xff]
    %v165 = vld [vmem:[#allocation7 + $0x90] sm:$0xff]
    %v166 = vld [vmem:[#allocation7 + $0x98] sm:$0xff]
    %v167 = vld [vmem:[#allocation7 + $0xa0] sm:$0xff]
    %v168 = vld [vmem:[#allocation7 + $0xa8] sm:$0xff]
    %v169 = vld [vmem:[#allocation7 + $0xb0] sm:$0xff]
    %v170 = vld [vmem:[#allocation7 + $0xb8] sm:$0xff]
    %v171 = vld [vmem:[#allocation7 + $0xc0] sm:$0xff]
    %v172 = vld [vmem:[#allocation7 + $0xc8] sm:$0xff]
    %v173 = vld [vmem:[#allocation7 + $0xd0] sm:$0xff]
    %v174 = vld [vmem:[#allocation7 + $0xd8] sm:$0xff]
    %v175 = vld [vmem:[#allocation7 + $0xe0] sm:$0xff]
    %v176 = vld [vmem:[#allocation7 + $0xe8] sm:$0xff]
    %v177 = vld [vmem:[#allocation7 + $0xf0] sm:$0xff]
    %v178 = vld [vmem:[#allocation7 + $0xf8] sm:$0xff]
    %v179 = vld [vmem:[%s4] sm:$0x1]
    %v181 = vperm.slane %v179, 0
    %183 = vmatpush.msra.mxu0 %v162
    %184 = vmatpush.msra.mxu0 %v161
    %185 = vmatpush.msra.mxu0 %v160
    %186 = vmatpush.msra.mxu0 %v159
    %187 = vmatpush.msra.mxu0 %v158
    %188 = vmatpush.msra.mxu0 %v157
    %189 = vmatpush.msra.mxu0 %v156
    %190 = vmatpush.msra.mxu0 %v155
    %191 = vmatpush.msra.mxu0 %v154
    %192 = vmatpush.msra.mxu0 %v153
    %193 = vmatpush.msra.mxu0 %v152
    %194 = vmatpush.msra.mxu0 %v151
    %195 = vmatpush.msra.mxu0 %v150
    %196 = vmatpush.msra.mxu0 %v149
    %197 = vmatpush.msra.mxu0 %v148
    %198 = vmatpush.msra.mxu0 %v147
    %199 = vmatmul.f32.gmra.mxu0 %v69
    %v200 = vpop.f32.mrf.mxu0
    %v201 = vadd.f32 %v181, %v200
    %202 = vdwg.mxu0
    %203 = vmatpush.msra.mxu0 %v178
    %204 = vmatpush.msra.mxu0 %v177
    %205 = vmatpush.msra.mxu0 %v176
    %206 = vmatpush.msra.mxu0 %v175
    %207 = vmatpush.msra.mxu0 %v174
    %208 = vmatpush.msra.mxu0 %v173
    %209 = vmatpush.msra.mxu0 %v172
    %210 = vmatpush.msra.mxu0 %v171
    %211 = vmatpush.msra.mxu0 %v170
    %212 = vmatpush.msra.mxu0 %v169
    %213 = vmatpush.msra.mxu0 %v168
    %214 = vmatpush.msra.mxu0 %v167
    %215 = vmatpush.msra.mxu0 %v166
    %216 = vmatpush.msra.mxu0 %v165
    %217 = vmatpush.msra.mxu0 %v164
    %218 = vmatpush.msra.mxu0 %v163
    %219 = vmatmul.f32.gmra.mxu0 %v70
    %v220 = vpop.f32.mrf.mxu0
    %v221 = vadd.f32 %v201, %v220
    %222 = vdwg.mxu0
    %223 = vst [vmem:[#allocation8] sm:$0xff] %v145
    %v224 = vmul.f32 %v221, 1.442695
    %v225 = vpow.pop %v224
    %v226 = vadd.f32 %v225, 0.01
    %227 = vst [vmem:[#allocation9] sm:$0xff] %v226
    // Predicated region
    $region34: #{tpu_custom_call.1} parent=1 // pred_check
      _
    $region35: #{tpu_custom_call.1} parent=1 // pred_check_branch
      %229 = sbr.rel (0) target = $region37
    $region36: #{tpu_custom_call.1} parent=1 // pred_region
      %231 = vsyncadd [#allocation4], 0
      %s233 = sshll.u32 [#allocation8], 4
      %s234 = int_to_ptr.vmem [resolvable:$true] %s233
      %s235 = sshll.u32 %s5, 4
      %s236 = int_to_ptr.hbm [resolvable:$true] %s235
      %238 = dma.vmem_to_hbm [thread:$0]  %s234, 128, %s236, [#allocation4]
    $region37: #{tpu_custom_call.1} parent=1 // pred_fallthru
      _
    // Predicated region
    $region38: #{tpu_custom_call.1} parent=1 // pred_check
      _
    $region39: #{tpu_custom_call.1} parent=1 // pred_check_branch
      %240 = sbr.rel (0) target = $region41
    $region40: #{tpu_custom_call.1} parent=1 // pred_region
      %242 = vsyncadd [#allocation10], 0
      %s244 = sshll.u32 [#allocation9], 4
      %s245 = int_to_ptr.vmem [resolvable:$true] %s244
      %s246 = sshll.u32 %s6, 4
      %s247 = int_to_ptr.hbm [resolvable:$true] %s246
      %249 = dma.vmem_to_hbm [thread:$0]  %s245, 128, %s247, [#allocation10]
    $region41: #{tpu_custom_call.1} parent=1 // pred_fallthru
      _
    // Predicated region
    $region42: #{tpu_custom_call.1} parent=1 // pred_check
      _
    $region43: #{tpu_custom_call.1} parent=1 // pred_check_branch
      %251 = sbr.rel (0) target = $region45
    $region44: #{tpu_custom_call.1} parent=1 // pred_region
      %253 = dma.done [#allocation4], 128
    $region45: #{tpu_custom_call.1} parent=1 // pred_fallthru
      _
    // Predicated region
    $region46: #{tpu_custom_call.1} parent=1 // pred_check
      _
    $region47: #{tpu_custom_call.1} parent=1 // pred_check_branch
      %255 = sbr.rel (0) target = $region49
    $region48: #{tpu_custom_call.1} parent=1 // pred_region
      %257 = dma.done [#allocation10], 128
    $region49: #{tpu_custom_call.1} parent=1 // pred_fallthru
      _
    %258 = vsyncpa [#allocation3], 1
    %259 = vsyncpa [#allocation6], 1
    %260 = vsyncpa [#allocation4], 1
    %261 = vsyncpa [#allocation10], 1

</llo_original>
